<compile_context>
chip_gen: v7x
topology: tpu7x:2x2x1
jax: 0.10.0
libtpu: 0.0.40
codegen_flags: <defaults>
</compile_context>

<pallas_src>
import math
import jax
import jax.numpy as jnp
from jax import lax
from jax.experimental import pallas as pl
from jax.experimental.pallas import tpu as pltpu

F32 = jnp.float32
BF16 = jnp.bfloat16

# contract the edge (sublane) axis of both operands: one-hot^T @ values without
# materializing / transposing a second one-hot.
_SCATTER_DIMS = (((0,), (0,)), ((), ()))


def _vmem_limit_bytes():
    # Per-generation scoped-VMEM budget (leave headroom below physical capacity):
    # ~112 MiB on v5e/v6e (128 MiB physical), ~48 MiB on v7x (64 MiB physical).
    try:
        cap = pltpu.get_tpu_info().vmem_capacity_bytes
        return int(max(32 * 1024 * 1024,
                       min(cap - 16 * 1024 * 1024, 112 * 1024 * 1024)))
    except Exception:
        return 32 * 1024 * 1024


# --------------------------- encoder kernel ----------------------------------

def _encoder_kernel(x_ref, wn_ref, bn_ref, ea_ref, we_ref, be_ref, nf_ref, ef_ref):
    nf_ref[...] = (jnp.dot(x_ref[...], wn_ref[...],
                           preferred_element_type=F32) + bn_ref[...])
    ef_ref[...] = (jnp.dot(ea_ref[...], we_ref[...],
                           preferred_element_type=F32) + be_ref[...])


def encode(x, edge_attr_in, params):
    N = x.shape[0]
    E = edge_attr_in.shape[0]
    H = params['node_enc_W'].shape[1]
    return pl.pallas_call(
        _encoder_kernel,
        out_shape=(jax.ShapeDtypeStruct((N, H), F32),
                   jax.ShapeDtypeStruct((E, H), F32)),
    )(x, params['node_enc_W'], params['node_enc_b'],
      edge_attr_in, params['edge_enc_W'], params['edge_enc_b'])


# --------------------------- fused GT-layer kernel ----------------------------

def _make_layer_kernel(H, num_heads, final):
    d_head = H // num_heads
    inv_sqrt_d = 1.0 / math.sqrt(d_head)

    def bn_eval(x, p):
        # p rows: gamma, beta, running_mean, running_var (BatchNorm1d eval, eps=1e-5)
        return ((x - p[2:3, :]) * lax.rsqrt(p[3:4, :] + 1e-5)
                * p[0:1, :] + p[1:2, :])

    def kernel(nf_ref, ef_ref, esc_ref, hm_ref, bn1n_ref, bn1e_ref, wqkv_ref,
               wef_ref, wed_ref, onw_ref, onb_ref, bn2n_ref, w1n_ref, w2n_ref,
               *rest):
        if final:
            nout_ref, qkv_sc, wv_sc, z_sc = rest
        else:
            (oew_ref, oeb_ref, bn2e_ref, w1e_ref, w2e_ref,
             nout_ref, eout_ref, qkv_sc, wv_sc, z_sc) = rest

        step = pl.program_id(0)
        nsteps = pl.num_programs(0)
        N = nf_ref.shape[0]
        TE = ef_ref.shape[0]

        # ---- once per layer: BN1(node) -> Q/K/V projections into (3,N,H) bf16 scratch;
        # zero the scatter accumulators.
        # TODO(synk): could be hoisted to its own node-tiled pallas_call for very large N.
        @pl.when(step == 0)
        def _init():
            nf_n = bn_eval(nf_ref[...], bn1n_ref[...]).astype(BF16)
            for i in range(3):   # static unroll: q, k, v (leading-axis ref indexing)
                qkv_sc[i] = jnp.dot(nf_n, wqkv_ref[i],
                                    preferred_element_type=F32).astype(BF16)
            wv_sc[...] = jnp.zeros_like(wv_sc)
            z_sc[...] = jnp.zeros_like(z_sc)

        # ---- per edge-block attention ----
        # packed per-edge scalars: col0=row(src), col1=col(dst), col2=0.1*dist
        esc = esc_ref[...]
        row_i = esc[:, 0:1].astype(jnp.int32)
        col_i = esc[:, 1:2].astype(jnp.int32)
        dist_s = esc[:, 2:3]

        ef_in = ef_ref[...]                                # residual input (pre-BN)
        ef_n = bn_eval(ef_in, bn1e_ref[...])

        # gather one-hots built in-kernel (never materialized in HBM). Padded edges
        # carry dst sentinel == N -> all-zero column -> no scatter contribution.
        iota = lax.broadcasted_iota(jnp.int32, (TE, N), 1)
        g_row = jnp.where(iota == row_i, 1.0, 0.0).astype(BF16)   # [TE, N] src gather
        g_col = jnp.where(iota == col_i, 1.0, 0.0).astype(BF16)   # [TE, N] dst gather/scatter

        q_col = jnp.dot(g_col, qkv_sc[0], preferred_element_type=F32)   # [TE, H]
        k_row = jnp.dot(g_row, qkv_sc[1], preferred_element_type=F32)   # [TE, H]
        v_row = jnp.dot(g_row, qkv_sc[2], preferred_element_type=F32)   # [TE, H]

        # edge projection: cat([bn(edge_feats), 0.1*dist]) @ We  (We split feat/dist rows)
        eproj = (jnp.dot(ef_n.astype(BF16), wef_ref[...], preferred_element_type=F32)
                 + dist_s * wed_ref[...])                                 # [TE, H]

        alpha = jnp.clip(k_row * q_col * inv_sqrt_d, -5.0, 5.0) * eproj

        # per-head sum broadcast over that head's lanes via block-diag ones mask (MXU)
        alphax = jnp.exp(jnp.clip(
            jnp.dot(alpha.astype(BF16), hm_ref[...], preferred_element_type=F32),
            -5.0, 5.0))

        # scatter-add onto destination nodes: contract the edge axis of both operands
        # (no transposed one-hot), accumulate f32 in VMEM.
        wv_sc[...] += lax.dot_general(g_col, (v_row * alphax).astype(BF16),
                                      _SCATTER_DIMS, preferred_element_type=F32)
        z_sc[...] += lax.dot_general(g_col, alphax.astype(BF16),
                                     _SCATTER_DIMS, preferred_element_type=F32)

        if not final:
            # edge branch: e_out(=alpha) -> (dropout=id) -> O_edge -> +residual
            #              -> BN2 -> MLP(SiLU) -> +residual
            # TODO(synk): Dropout layers are identity (eval-mode inference semantics).
            e1 = (jnp.dot(alpha.astype(BF16), oew_ref[...], preferred_element_type=F32)
                  + oeb_ref[...] + ef_in)
            e2 = bn_eval(e1, bn2e_ref[...]).astype(BF16)
            he = jnp.dot(e2, w1e_ref[...], preferred_element_type=F32)
            he = (he * jax.nn.sigmoid(he)).astype(BF16)           # SiLU
            eout_ref[...] = (jnp.dot(he, w2e_ref[...],
                                     preferred_element_type=F32) + e1)

        # ---- finalize node branch after the last edge block ----
        @pl.when(step == nsteps - 1)
        def _finalize():
            h = wv_sc[...] / (z_sc[...] + 1e-6)     # exact divide (matches reference)
            n1 = (jnp.dot(h.astype(BF16), onw_ref[...], preferred_element_type=F32)
                  + onb_ref[...] + nf_ref[...])
            n2 = bn_eval(n1, bn2n_ref[...]).astype(BF16)
            hn = jnp.dot(n2, w1n_ref[...], preferred_element_type=F32)
            hn = (hn * jax.nn.sigmoid(hn)).astype(BF16)           # SiLU
            nout_ref[...] = (jnp.dot(hn, w2n_ref[...],
                                     preferred_element_type=F32) + n1)

    return kernel


def gt_layer_call(p, node_feats, edge_feats_p, escalars_p, head_mask,
                  num_heads, edge_block, vmem_limit):
    N, H = node_feats.shape
    E_pad = edge_feats_p.shape[0]
    TE = edge_block
    nblk = E_pad // TE
    final = p['final']

    def full_spec(arr):
        nd = arr.ndim
        return pl.BlockSpec(arr.shape, lambda e, _nd=nd: (0,) * _nd)

    def edge_spec(w):
        return pl.BlockSpec((TE, w), lambda e: (e, 0))

    inputs = [node_feats, edge_feats_p, escalars_p, head_mask,
              p['bn1_node'], p['bn1_edge'], p['Wqkv'],
              p['We_feat'], p['We_dist'], p['O_node_Wt'], p['O_node_b'],
              p['bn2_node'], p['mlp_node_W1'], p['mlp_node_W2']]
    in_specs = [full_spec(node_feats), edge_spec(H),
                edge_spec(escalars_p.shape[1]), full_spec(head_mask),
                full_spec(p['bn1_node']), full_spec(p['bn1_edge']),
                full_spec(p['Wqkv']), full_spec(p['We_feat']),
                full_spec(p['We_dist']), full_spec(p['O_node_Wt']),
                full_spec(p['O_node_b']), full_spec(p['bn2_node']),
                full_spec(p['mlp_node_W1']), full_spec(p['mlp_node_W2'])]

    if not final:
        inputs += [p['O_edge_Wt'], p['O_edge_b'], p['bn2_edge'],
                   p['mlp_edge_W1'], p['mlp_edge_W2']]
        in_specs += [full_spec(p['O_edge_Wt']), full_spec(p['O_edge_b']),
                     full_spec(p['bn2_edge']), full_spec(p['mlp_edge_W1']),
                     full_spec(p['mlp_edge_W2'])]
        out_shape = (jax.ShapeDtypeStruct((N, H), F32),
                     jax.ShapeDtypeStruct((E_pad, H), F32))
        out_specs = (pl.BlockSpec((N, H), lambda e: (0, 0)), edge_spec(H))
    else:
        out_shape = jax.ShapeDtypeStruct((N, H), F32)
        out_specs = pl.BlockSpec((N, H), lambda e: (0, 0))

    # Node-resident VMEM budget: QKV scratch (bf16) + two f32 accumulators + node blocks.
    # TODO(synk): for very large N (esp. v7x 64 MiB VMEM) add a node-tile grid axis with
    # per-tile partial accumulators instead of keeping the whole node table resident.
    resident = 3 * N * H * 2 + 2 * N * H * 4 + 2 * N * H * 4
    assert resident < vmem_limit, "node-resident state exceeds VMEM budget; tile N"

    out = pl.pallas_call(
        _make_layer_kernel(H, num_heads, final),
        out_shape=out_shape,
        grid_spec=pltpu.PrefetchScalarGridSpec(
            num_scalar_prefetch=0,
            grid=(nblk,),                      # reduction over edge blocks
            in_specs=in_specs,
            out_specs=out_specs,
            scratch_shapes=[pltpu.VMEM((3, N, H), BF16),   # Q / K / V
                            pltpu.VMEM((N, H), F32),       # wV accumulator
                            pltpu.VMEM((N, H), F32)]),     # Z accumulator
        compiler_params=pltpu.CompilerParams(
            dimension_semantics=("arbitrary",),
            vmem_limit_bytes=vmem_limit),
    )(*inputs)

    if final:
        return out, edge_feats_p
    return out  # (node_out, edge_out_padded)


# --------------------------- parameters --------------------------------------

def init_params(key, in_channels, edge_features, H, num_layers):
    keys = iter(jax.random.split(key, 4 + 16 * max(1, num_layers)))

    def lin_t(fi, fo, dtype=F32):
        # TODO(synk): glorot_orthogonal replaced with deterministic scaled-normal init
        # (synthetic weights; orthogonalization is init-time only, not forward compute).
        # Stored pre-transposed as [fan_in, fan_out] so the forward never transposes.
        w = jax.random.normal(next(keys), (fi, fo), F32) * math.sqrt(2.0 / (fi + fo))
        return w.astype(dtype)

    def bn():
        # rows: gamma, beta, running_mean, running_var (PyTorch BatchNorm1d defaults,
        # eval-mode running statistics)
        return jnp.stack([jnp.ones((H,), F32), jnp.zeros((H,), F32),
                          jnp.zeros((H,), F32), jnp.ones((H,), F32)], axis=0)

    params = {
        'node_enc_W': lin_t(in_channels, H), 'node_enc_b': jnp.zeros((1, H), F32),
        'edge_enc_W': lin_t(edge_features, H), 'edge_enc_b': jnp.zeros((1, H), F32),
        'layers': [],
    }
    for l in range(num_layers):
        final = (l == num_layers - 1)
        we_full = lin_t(H + 1, H)   # edge projection weight [(H+1), H]
        p = {
            'final': final,
            'bn1_node': bn(), 'bn1_edge': bn(),
            # Q/K/V stacked on a leading axis -> leading-axis ref indexing in-kernel
            'Wqkv': jnp.stack([lin_t(H, H, BF16), lin_t(H, H, BF16),
                               lin_t(H, H, BF16)], axis=0),
            'We_feat': we_full[:H, :].astype(BF16),
            'We_dist': we_full[H:H + 1, :],                 # f32 rank-1 broadcast term
            'O_node_Wt': lin_t(H, H, BF16), 'O_node_b': jnp.zeros((1, H), F32),
            'bn2_node': bn(),
            'mlp_node_W1': lin_t(H, 2 * H, BF16), 'mlp_node_W2': lin_t(2 * H, H, BF16),
        }
        if not final:
            p.update({
                'O_edge_Wt': lin_t(H, H, BF16), 'O_edge_b': jnp.zeros((1, H), F32),
                'bn2_edge': bn(),
                'mlp_edge_W1': lin_t(H, 2 * H, BF16),
                'mlp_edge_W2': lin_t(2 * H, H, BF16),
            })
        params['layers'].append(p)
    return params


def _head_mask(H, num_heads):
    # block-diagonal ones mask: alpha @ mask == per-head sum broadcast over head lanes
    idx = jnp.arange(H) // (H // num_heads)
    return (idx[:, None] == idx[None, :]).astype(BF16)


# --------------------------- forward pass -------------------------------------

def graph_transformer_forward(params, x, edge_attr, edge_index, coords,
                              num_heads, edge_block=256):
    N = x.shape[0]
    E = edge_attr.shape[0]
    H = params['node_enc_W'].shape[1]
    assert H % num_heads == 0

    # encoders (single fused pallas_call); module slices edge_attr[:, 1:]
    node_feats, edge_feats = encode(x, edge_attr[:, 1:], params)

    # geometric edge feature: ||pos[row]-pos[col]||  (update_coords=False in the
    # reference, so coords/distances are layer-invariant -> computed once here).
    # TODO(synk): coords_update branch never executes (update_coords=False).
    row = edge_index[0].astype(jnp.int32)
    col = edge_index[1].astype(jnp.int32)
    dvec = coords[row] - coords[col]
    dist = jnp.sqrt(jnp.sum(dvec * dvec, axis=-1))               # [E]

    # pad edge axis to a multiple of the edge block; padded edges use dst sentinel N
    # (never matches the in-kernel iota over [0, N)) -> zero contribution to node
    # aggregation; padded edge-output rows are sliced off at the end.
    TE = edge_block
    E_pad = ((E + TE - 1) // TE) * TE
    pad = E_pad - E
    edge_feats_p = jnp.pad(edge_feats, ((0, pad), (0, 0)))
    # single packed per-edge scalar stream: [row, col, 0.1*dist, 0]
    row_f = jnp.pad(row.astype(F32), (0, pad))
    col_f = jnp.pad(col.astype(F32), (0, pad), constant_values=float(N))
    dist_s = jnp.pad(dist * 0.1, (0, pad))
    escalars = jnp.stack([row_f, col_f, dist_s, jnp.zeros_like(row_f)], axis=1)

    head_mask = _head_mask(H, num_heads)
    vmem_limit = _vmem_limit_bytes()

    for p in params['layers']:
        node_feats, edge_feats_p = gt_layer_call(
            p, node_feats, edge_feats_p, escalars, head_mask,
            num_heads, TE, vmem_limit)

    # data.x = node_feats ; data.edge_attr = edge_feats ; data.pos = coords
    return node_feats, edge_feats_p[:E], coords


# --------------------------- demo / smoke test --------------------------------

if __name__ == "__main__":
    in_channels = 16
    edge_features = 10          # module slices edge_attr[:, 1:] -> raw input has 11 cols
    H = 32                      # num_hidden_channels (module default is 128; small demo)
    num_heads = 4
    num_layers = 2              # 1 GraphTransformerModule + 1 FinalGraphTransformerModule
    N, E = 16, 48

    key = jax.random.PRNGKey(0)
    k1, k2, k3, k4, kp = jax.random.split(key, 5)
    x = jax.random.normal(k1, (N, in_channels), F32)
    edge_attr = jax.random.normal(k2, (E, edge_features + 1), F32)
    edge_index = jax.random.randint(k3, (2, E), 0, N, dtype=jnp.int32)
    coords = jax.random.normal(k4, (N, 3), F32)

    params = init_params(kp, in_channels, edge_features, H, num_layers)

    node_out, edge_out, coords_out = graph_transformer_forward(
        params, x, edge_attr, edge_index, coords, num_heads, edge_block=256)
    jax.block_until_ready((node_out, edge_out, coords_out))

    assert node_out.shape == (N, H)
    assert edge_out.shape == (E, H)
    assert coords_out.shape == (N, 3)
    assert bool(jnp.all(jnp.isfinite(node_out)))
    assert bool(jnp.all(jnp.isfinite(edge_out)))
    print("KERNEL_OK")
</pallas_src>

<mosaic_0001>
module attributes {stable_mosaic.version = 11 : i64} {
  func.func @_encoder_kernel(%arg0: memref<16x16xf32, #tpu.memory_space<vmem>>, %arg1: memref<16x32xf32, #tpu.memory_space<vmem>>, %arg2: memref<1x32xf32, #tpu.memory_space<vmem>>, %arg3: memref<48x10xf32, #tpu.memory_space<vmem>>, %arg4: memref<10x32xf32, #tpu.memory_space<vmem>>, %arg5: memref<1x32xf32, #tpu.memory_space<vmem>>, %arg6: memref<16x32xf32, #tpu.memory_space<vmem>>, %arg7: memref<48x32xf32, #tpu.memory_space<vmem>>) attributes {dimension_semantics = [], scalar_prefetch = 0 : i64, scratch_operands = 0 : i64, tpu.core_type = #tpu.core_type<tc>} {
    %c0 = arith.constant 0 : index
    %c0_0 = arith.constant 0 : index
    %0 = vector.load %arg0[%c0, %c0_0] : memref<16x16xf32, #tpu.memory_space<vmem>>, vector<16x16xf32>
    %c0_1 = arith.constant 0 : index
    %c0_2 = arith.constant 0 : index
    %1 = vector.load %arg1[%c0_1, %c0_2] : memref<16x32xf32, #tpu.memory_space<vmem>>, vector<16x32xf32>
    %cst = arith.constant dense<0.000000e+00> : vector<16x32xf32>
    %2 = tpu.matmul %0, %1, %cst {dimension_numbers = #tpu.dot_dimension_numbers<[1], [0], [0], [1], [0, 0, 1, 1], [], []>} : vector<16x16xf32>, vector<16x32xf32>, vector<16x32xf32> -> vector<16x32xf32>
    %c0_3 = arith.constant 0 : index
    %c0_4 = arith.constant 0 : index
    %3 = vector.load %arg2[%c0_3, %c0_4] : memref<1x32xf32, #tpu.memory_space<vmem>>, vector<1x32xf32>
    %4 = vector.broadcast %3 : vector<1x32xf32> to vector<16x32xf32>
    %5 = arith.addf %2, %4 : vector<16x32xf32>
    %c0_5 = arith.constant 0 : index
    %c0_6 = arith.constant 0 : index
    %6 = vector.load %arg6[%c0_5, %c0_6] : memref<16x32xf32, #tpu.memory_space<vmem>>, vector<16x32xf32>
    tpu.vector_store %arg6[%c0_5, %c0_6], %5 {strides = array<i32>} : memref<16x32xf32, #tpu.memory_space<vmem>>, vector<16x32xf32>,
    %c0_7 = arith.constant 0 : index
    %c0_8 = arith.constant 0 : index
    %7 = vector.load %arg3[%c0_7, %c0_8] : memref<48x10xf32, #tpu.memory_space<vmem>>, vector<48x10xf32>
    %c0_9 = arith.constant 0 : index
    %c0_10 = arith.constant 0 : index
    %8 = vector.load %arg4[%c0_9, %c0_10] : memref<10x32xf32, #tpu.memory_space<vmem>>, vector<10x32xf32>
    %cst_11 = arith.constant dense<0.000000e+00> : vector<48x32xf32>
    %9 = tpu.matmul %7, %8, %cst_11 {dimension_numbers = #tpu.dot_dimension_numbers<[1], [0], [0], [1], [0, 0, 1, 1], [], []>} : vector<48x10xf32>, vector<10x32xf32>, vector<48x32xf32> -> vector<48x32xf32>
    %c0_12 = arith.constant 0 : index
    %c0_13 = arith.constant 0 : index
    %10 = vector.load %arg5[%c0_12, %c0_13] : memref<1x32xf32, #tpu.memory_space<vmem>>, vector<1x32xf32>
    %11 = vector.broadcast %10 : vector<1x32xf32> to vector<48x32xf32>
    %12 = arith.addf %9, %11 : vector<48x32xf32>
    %c0_14 = arith.constant 0 : index
    %c0_15 = arith.constant 0 : index
    %13 = vector.load %arg7[%c0_14, %c0_15] : memref<48x32xf32, #tpu.memory_space<vmem>>, vector<48x32xf32>
    tpu.vector_store %arg7[%c0_14, %c0_15], %12 {strides = array<i32>} : memref<48x32xf32, #tpu.memory_space<vmem>>, vector<48x32xf32>,
    return
  }
}

</mosaic_0001>

<llo_original>
// kernel: tpu_custom_call.1
$region0: #{tpu_custom_call.1}
  #allocation0 [shape = 'u32[]', space=smem, size = 0x4, offset = 0x4, fixed_abs, tag = 'smem constant byte address 0x4 - core index']
  #allocation1 [shape = 'u32[144,128]{1,0:T(1,128)}', space=vmem, size = 0x12000, scoped, tag = 'internal scratch']
  %s0 = inlined_call_operand.vmem [shape: f32[16,16], index: 0, kind: input, shape index: {}]
  %s1 = inlined_call_operand.vmem [shape: f32[16,32], index: 1, kind: input, shape index: {}]
  %s2 = inlined_call_operand.vmem [shape: f32[1,32], index: 2, kind: input, shape index: {}]
  %s3 = inlined_call_operand.vmem [shape: f32[48,10], index: 3, kind: input, shape index: {}]
  %s4 = inlined_call_operand.vmem [shape: f32[10,32], index: 4, kind: input, shape index: {}]
  %s5 = inlined_call_operand.vmem [shape: f32[1,32], index: 5, kind: input, shape index: {}]
  %s6 = inlined_call_operand.hbm [shape: f32[16,32], index: 6, kind: output, shape index: {0}]
  %s7 = inlined_call_operand.vmem [shape: f32[48,32], index: 7, kind: output, shape index: {1}]
  %8 = xla_tuple %s6, %s7
  %s9 = sld [smem:[#allocation0]]
  $region42: #{tpu_custom_call.1} parent=0
    _
  %s11 = ssub.s32 1, %s9
  %s12 = scalar_select 0, %s11, %s9
  $region1: #{tpu_custom_call.1} parent=0
    #allocation2 [shape = 'u8[8192]{0}', space=vmem, size = 0x2000, scoped, tag = 'output window, operand 0, single buffered']
    #allocation3 [shape = 's32[1]{0}', space=sflag, size = 0x4, scoped, tag = 'scoped memory for tpu_custom_call.1']
    %13 = vsyncpa [#allocation3], 0
    // Predicated region
    $region2: #{tpu_custom_call.1} parent=1 // pred_check
      _
    $region3: #{tpu_custom_call.1} parent=1 // pred_check_branch
      %15 = sbr.rel (0) target = $region5
    $region4: #{tpu_custom_call.1} parent=1 // pred_region
      _
    $region5: #{tpu_custom_call.1} parent=1 // pred_fallthru
      _
    // Predicated region
    $region6: #{tpu_custom_call.1} parent=1 // pred_check
      _
    $region7: #{tpu_custom_call.1} parent=1 // pred_check_branch
      %17 = sbr.rel (0) target = $region9
    $region8: #{tpu_custom_call.1} parent=1 // pred_region
      _
    $region9: #{tpu_custom_call.1} parent=1 // pred_fallthru
      _
    // Predicated region
    $region10: #{tpu_custom_call.1} parent=1 // pred_check
      _
    $region11: #{tpu_custom_call.1} parent=1 // pred_check_branch
      %19 = sbr.rel (0) target = $region13
    $region12: #{tpu_custom_call.1} parent=1 // pred_region
      _
    $region13: #{tpu_custom_call.1} parent=1 // pred_fallthru
      _
    // Predicated region
    $region14: #{tpu_custom_call.1} parent=1 // pred_check
      _
    $region15: #{tpu_custom_call.1} parent=1 // pred_check_branch
      %21 = sbr.rel (0) target = $region17
    $region16: #{tpu_custom_call.1} parent=1 // pred_region
      _
    $region17: #{tpu_custom_call.1} parent=1 // pred_fallthru
      _
    // Predicated region
    $region18: #{tpu_custom_call.1} parent=1 // pred_check
      _
    $region19: #{tpu_custom_call.1} parent=1 // pred_check_branch
      %23 = sbr.rel (0) target = $region21
    $region20: #{tpu_custom_call.1} parent=1 // pred_region
      _
    $region21: #{tpu_custom_call.1} parent=1 // pred_fallthru
      _
    // Predicated region
    $region22: #{tpu_custom_call.1} parent=1 // pred_check
      _
    $region23: #{tpu_custom_call.1} parent=1 // pred_check_branch
      %25 = sbr.rel (0) target = $region25
    $region24: #{tpu_custom_call.1} parent=1 // pred_region
      _
    $region25: #{tpu_custom_call.1} parent=1 // pred_fallthru
      _
    %v26 = vld [vmem:[%s0] sm:$0xff]
    %v27 = vld [vmem:[%s0 + $0x8] sm:$0xff]
    %v28 = vld [vmem:[%s1] sm:$0xff]
    %v29 = vld [vmem:[%s1 + $0x8] sm:$0xff]
    %v30 = vld [vmem:[%s2] sm:$0x1]
    %v32 = vlaneseq
    %v33 = vshrl.u32 %v32, 7
    %v34 = vsub.s32 0, %v33
    %v35 = vrot.slane %v30, %v34
    %vm37 = vcmask 130048
    %v39 = vsel %vm37, %v26, 0
    %v42 = vsel %vm37, %v27, 0
    %44 = vmatprep.subr.mxu0 0.0
    %45 = vmatpush1.msra.mxu0 %v28
    %46 = vmatprep.subr.mxu0 0.0
    %47 = vmatpush1.msra.mxu0 %v29
    %48 = vmatprep.subr.mxu0 0.0
    %49 = vmatpush1.msra.mxu0 0.0
    %50 = vmatprep.subr.mxu0 0.0
    %51 = vmatpush1.msra.mxu0 0.0
    %52 = vmatprep.subr.mxu0 0.0
    %53 = vmatpush1.msra.mxu0 0.0
    %54 = vmatprep.subr.mxu0 0.0
    %55 = vmatpush1.msra.mxu0 0.0
    %56 = vmatprep.subr.mxu0 0.0
    %57 = vmatpush1.msra.mxu0 0.0
    %58 = vmatprep.subr.mxu0 0.0
    %59 = vmatpush1.msra.mxu0 0.0
    %60 = vmatprep.subr.mxu0 0.0
    %61 = vmatpush1.msra.mxu0 0.0
    %62 = vmatprep.subr.mxu0 0.0
    %63 = vmatpush1.msra.mxu0 0.0
    %64 = vmatprep.subr.mxu0 0.0
    %65 = vmatpush1.msra.mxu0 0.0
    %66 = vmatprep.subr.mxu0 0.0
    %67 = vmatpush1.msra.mxu0 0.0
    %68 = vmatprep.subr.mxu0 0.0
    %69 = vmatpush1.msra.mxu0 0.0
    %70 = vmatprep.subr.mxu0 0.0
    %71 = vmatpush1.msra.mxu0 0.0
    %72 = vmatprep.subr.mxu0 0.0
    %73 = vmatpush1.msra.mxu0 0.0
    %74 = vmatprep.subr.mxu0 0.0
    %75 = vmatpush1.msra.mxu0 0.0
    %76 = vmatprep.subr.mxu0 0.0
    %77 = vmatpush1.msra.mxu0 0.0
    %78 = vmatprep.subr.mxu0 0.0
    %79 = vmatpush1.msra.mxu0 0.0
    %80 = vmatprep.subr.mxu0 0.0
    %81 = vmatpush1.msra.mxu0 0.0
    %82 = vmatprep.subr.mxu0 0.0
    %83 = vmatpush1.msra.mxu0 0.0
    %84 = vmatprep.subr.mxu0 0.0
    %85 = vmatpush1.msra.mxu0 0.0
    %86 = vmatprep.subr.mxu0 0.0
    %87 = vmatpush1.msra.mxu0 0.0
    %88 = vmatprep.subr.mxu0 0.0
    %89 = vmatpush1.msra.mxu0 0.0
    %90 = vmatprep.subr.mxu0 0.0
    %91 = vmatpush1.msra.mxu0 0.0
    %92 = vmatprep.subr.mxu0 0.0
    %93 = vmatpush1.msra.mxu0 0.0
    %94 = vmatprep.subr.mxu0 0.0
    %95 = vmatpush1.msra.mxu0 0.0
    %96 = vmatprep.subr.mxu0 0.0
    %97 = vmatpush1.msra.mxu0 0.0
    %98 = vmatprep.subr.mxu0 0.0
    %99 = vmatpush1.msra.mxu0 0.0
    %100 = vmatprep.subr.mxu0 0.0
    %101 = vmatpush1.msra.mxu0 0.0
    %102 = vmatprep.subr.mxu0 0.0
    %103 = vmatpush1.msra.mxu0 0.0
    %104 = vmatprep.subr.mxu0 0.0
    %105 = vmatpush1.msra.mxu0 0.0
    %106 = vmatprep.subr.mxu0 0.0
    %107 = vmatpush1.msra.mxu0 0.0
    %108 = vmatprep.mubr.f32.mxu0 0.0
    %109 = vmatmul.mubr.f32.gmra.mrb[0].mxu0 %v39
    %v110 = vpop.f32.mrb[0].mxu0
    %v111 = vadd.f32 %v35, %v110
    %v112 = vpop.f32.mrb[0].mxu0
    %113 = vmatprep.mubr.f32.mxu0 0.0
    %114 = vmatmul.mubr.f32.gmra.mrb[0].mxu0 %v42
    %v115 = vpop.f32.mrb[0].mxu0
    %v116 = vadd.f32 %v35, %v115
    %v117 = vpop.f32.mrb[0].mxu0
    %118 = vdwg.mxu0
    %vm119 = vcmask 261120
    %120 = vst.msk [vmem:[#allocation2] sm:$0xff] %vm119, %v111
    %121 = vst.msk [vmem:[#allocation2 + $0x8] sm:$0xff] %vm119, %v116
    %v122 = vld [vmem:[%s3] sm:$0xff]
    %v123 = vld [vmem:[%s3 + $0x8] sm:$0xff]
    %v124 = vld [vmem:[%s3 + $0x10] sm:$0xff]
    %v125 = vld [vmem:[%s3 + $0x18] sm:$0xff]
    %v126 = vld [vmem:[%s3 + $0x20] sm:$0xff]
    %v127 = vld [vmem:[%s3 + $0x28] sm:$0xff]
    %v128 = vld [vmem:[%s4] sm:$0xff]
    %v129 = vld [vmem:[%s4 + $0x8] sm:$0x3]
    %v130 = vld [vmem:[%s5] sm:$0x1]
    %v132 = vlaneseq
    %v133 = vshrl.u32 %v132, 7
    %v134 = vsub.s32 0, %v133
    %v135 = vrot.slane %v130, %v134
    %vm137 = vcmask 80896
    %v139 = vsel %vm137, %v122, 0
    %v142 = vsel %vm137, %v123, 0
    %v145 = vsel %vm137, %v124, 0
    %v148 = vsel %vm137, %v125, 0
    %v151 = vsel %vm137, %v126, 0
    %v154 = vsel %vm137, %v127, 0
    %vm156 = vcmask 1041408
    %v158 = vsel %vm156, %v129, 0
    %160 = vmatprep.subr.mxu0 0.0
    %161 = vmatpush1.msra.mxu0 %v128
    %162 = vmatprep.subr.mxu0 0.0
    %163 = vmatpush1.msra.mxu0 %v158
    %164 = vmatprep.subr.mxu0 0.0
    %165 = vmatpush1.msra.mxu0 0.0
    %166 = vmatprep.subr.mxu0 0.0
    %167 = vmatpush1.msra.mxu0 0.0
    %168 = vmatprep.subr.mxu0 0.0
    %169 = vmatpush1.msra.mxu0 0.0
    %170 = vmatprep.subr.mxu0 0.0
    %171 = vmatpush1.msra.mxu0 0.0
    %172 = vmatprep.subr.mxu0 0.0
    %173 = vmatpush1.msra.mxu0 0.0
    %174 = vmatprep.subr.mxu0 0.0
    %175 = vmatpush1.msra.mxu0 0.0
    %176 = vmatprep.subr.mxu0 0.0
    %177 = vmatpush1.msra.mxu0 0.0
    %178 = vmatprep.subr.mxu0 0.0
    %179 = vmatpush1.msra.mxu0 0.0
    %180 = vmatprep.subr.mxu0 0.0
    %181 = vmatpush1.msra.mxu0 0.0
    %182 = vmatprep.subr.mxu0 0.0
    %183 = vmatpush1.msra.mxu0 0.0
    %184 = vmatprep.subr.mxu0 0.0
    %185 = vmatpush1.msra.mxu0 0.0
    %186 = vmatprep.subr.mxu0 0.0
    %187 = vmatpush1.msra.mxu0 0.0
    %188 = vmatprep.subr.mxu0 0.0
    %189 = vmatpush1.msra.mxu0 0.0
    %190 = vmatprep.subr.mxu0 0.0
    %191 = vmatpush1.msra.mxu0 0.0
    %192 = vmatprep.subr.mxu0 0.0
    %193 = vmatpush1.msra.mxu0 0.0
    %194 = vmatprep.subr.mxu0 0.0
    %195 = vmatpush1.msra.mxu0 0.0
    %196 = vmatprep.subr.mxu0 0.0
    %197 = vmatpush1.msra.mxu0 0.0
    %198 = vmatprep.subr.mxu0 0.0
    %199 = vmatpush1.msra.mxu0 0.0
    %200 = vmatprep.subr.mxu0 0.0
    %201 = vmatpush1.msra.mxu0 0.0
    %202 = vmatprep.subr.mxu0 0.0
    %203 = vmatpush1.msra.mxu0 0.0
    %204 = vmatprep.subr.mxu0 0.0
    %205 = vmatpush1.msra.mxu0 0.0
    %206 = vmatprep.subr.mxu0 0.0
    %207 = vmatpush1.msra.mxu0 0.0
    %208 = vmatprep.subr.mxu0 0.0
    %209 = vmatpush1.msra.mxu0 0.0
    %210 = vmatprep.subr.mxu0 0.0
    %211 = vmatpush1.msra.mxu0 0.0
    %212 = vmatprep.subr.mxu0 0.0
    %213 = vmatpush1.msra.mxu0 0.0
    %214 = vmatprep.subr.mxu0 0.0
    %215 = vmatpush1.msra.mxu0 0.0
    %216 = vmatprep.subr.mxu0 0.0
    %217 = vmatpush1.msra.mxu0 0.0
    %218 = vmatprep.subr.mxu0 0.0
    %219 = vmatpush1.msra.mxu0 0.0
    %220 = vmatprep.subr.mxu0 0.0
    %221 = vmatpush1.msra.mxu0 0.0
    %222 = vmatprep.subr.mxu0 0.0
    %223 = vmatpush1.msra.mxu0 0.0
    %224 = vmatprep.mubr.f32.mxu0 0.0
    %225 = vmatmul.mubr.f32.gmra.mrb[0].mxu0 %v139
    %v226 = vpop.f32.mrb[0].mxu0
    %v227 = vadd.f32 %v135, %v226
    %v228 = vpop.f32.mrb[0].mxu0
    %229 = vmatprep.mubr.f32.mxu0 0.0
    %230 = vmatmul.mubr.f32.gmra.mrb[0].mxu0 %v142
    %v231 = vpop.f32.mrb[0].mxu0
    %v232 = vadd.f32 %v135, %v231
    %v233 = vpop.f32.mrb[0].mxu0
    %234 = vmatprep.mubr.f32.mxu0 0.0
    %235 = vmatmul.mubr.f32.gmra.mrb[0].mxu0 %v145
    %v236 = vpop.f32.mrb[0].mxu0
    %v237 = vadd.f32 %v135, %v236
    %v238 = vpop.f32.mrb[0].mxu0
    %239 = vmatprep.mubr.f32.mxu0 0.0
    %240 = vmatmul.mubr.f32.gmra.mrb[0].mxu0 %v148
    %v241 = vpop.f32.mrb[0].mxu0
    %v242 = vadd.f32 %v135, %v241
    %v243 = vpop.f32.mrb[0].mxu0
    %244 = vmatprep.mubr.f32.mxu0 0.0
    %245 = vmatmul.mubr.f32.gmra.mrb[0].mxu0 %v151
    %v246 = vpop.f32.mrb[0].mxu0
    %v247 = vadd.f32 %v135, %v246
    %v248 = vpop.f32.mrb[0].mxu0
    %249 = vmatprep.mubr.f32.mxu0 0.0
    %250 = vmatmul.mubr.f32.gmra.mrb[0].mxu0 %v154
    %v251 = vpop.f32.mrb[0].mxu0
    %v252 = vadd.f32 %v135, %v251
    %v253 = vpop.f32.mrb[0].mxu0
    %254 = vdwg.mxu0
    %255 = vst.msk [vmem:[%s7] sm:$0xff] %vm119, %v227
    %256 = vst.msk [vmem:[%s7 + $0x8] sm:$0xff] %vm119, %v232
    %257 = vst.msk [vmem:[%s7 + $0x10] sm:$0xff] %vm119, %v237
    %258 = vst.msk [vmem:[%s7 + $0x18] sm:$0xff] %vm119, %v242
    %259 = vst.msk [vmem:[%s7 + $0x20] sm:$0xff] %vm119, %v247
    %260 = vst.msk [vmem:[%s7 + $0x28] sm:$0xff] %vm119, %v252
    // Predicated region
    $region26: #{tpu_custom_call.1} parent=1 // pred_check
      _
    $region27: #{tpu_custom_call.1} parent=1 // pred_check_branch
      %262 = sbr.rel (0) target = $region29
    $region28: #{tpu_custom_call.1} parent=1 // pred_region
      %s264 = ssub.s32 256, 256
      %265 = vsyncadd [#allocation3], %s264
      %s266 = sshll.u32 [#allocation2], 4
      %s267 = int_to_ptr.vmem [resolvable:$true] %s266
      %272 = dma.vmem_to_hbm [thread:$0]  %s267, 256, %s6, [#allocation3], 128, 128, 8
    $region29: #{tpu_custom_call.1} parent=1 // pred_fallthru
      _
    // Predicated region
    $region30: #{tpu_custom_call.1} parent=1 // pred_check
      _
    $region31: #{tpu_custom_call.1} parent=1 // pred_check_branch
      %274 = sbr.rel (0) target = $region33
    $region32: #{tpu_custom_call.1} parent=1 // pred_region
      _
    $region33: #{tpu_custom_call.1} parent=1 // pred_fallthru
      _
    // Predicated region
    $region34: #{tpu_custom_call.1} parent=1 // pred_check
      _
    $region35: #{tpu_custom_call.1} parent=1 // pred_check_branch
      %276 = sbr.rel (0) target = $region37
    $region36: #{tpu_custom_call.1} parent=1 // pred_region
      %277 = dma.done [#allocation3], 256
    $region37: #{tpu_custom_call.1} parent=1 // pred_fallthru
      _
    // Predicated region
    $region38: #{tpu_custom_call.1} parent=1 // pred_check
      _
    $region39: #{tpu_custom_call.1} parent=1 // pred_check_branch
      %279 = sbr.rel (0) target = $region41
    $region40: #{tpu_custom_call.1} parent=1 // pred_region
      _
    $region41: #{tpu_custom_call.1} parent=1 // pred_fallthru
      _
    %280 = vsyncpa [#allocation3], 1

</llo_original>
